<compile_context>
chip_gen: v7x
topology: tpu7x:2x2x1
jax: 0.10.0
libtpu: 0.0.40
codegen_flags: <defaults>
</compile_context>

<pallas_src>
import functools
import math

import jax
import jax.numpy as jnp
from jax.experimental import pallas as pl
from jax.experimental.pallas import tpu as pltpu

OUT_PAD = 128  # lane-dense final-layer width (unmasked vector stores / dense out DMA)


# ----------------------------------------------------------------------------
# Kernel
# ----------------------------------------------------------------------------
def _mish(x):
    # mish(x) = x * tanh(softplus(x));  tanh(log(1+e)) = e*(e+2) / (e*(e+2) + 2)
    # One exp (EUP) + one reciprocal/divide; everything else on VALU slots.
    twenty = jnp.asarray(20.0, x.dtype)
    e = jnp.exp(jnp.minimum(x, twenty))
    nm1 = e * (e + jnp.asarray(2.0, x.dtype))
    if x.dtype == jnp.float32:
        y = x * nm1 * pl.reciprocal(nm1 + 2.0, approx=True)
    else:  # bf16 path (v6e/v7x have bf16 VPU/EUP): no f32 round-trip
        y = x * nm1 / (nm1 + jnp.asarray(2.0, x.dtype))
    return jnp.where(x > twenty, x, y)


def timemlp_kernel(
    txs_ref,                          # [bb, 1+A+S] = cat(time, x, state), f32
    freqs_ref, phase_ref,             # [1, t_dim] tiled freqs / phase (0 | pi/2)
    w1_ref, b1_ref,                   # time_mlp Linear-1 (bf16 W, f32 b)
    wm1txs_ref, w2m1t_ref, bm1_ref,   # mid layer 1: [0|x|state] row block + folded t block
    wm2_ref, bm2_ref,                 # mid layer 2
    wm3_ref, bm3_ref,                 # mid layer 3
    wf_ref, bf_ref,                   # final layer, zero-padded to OUT_PAD columns
    o_ref,                            # [bb, OUT_PAD]
    *, act_dtype,
):
    f32 = jnp.float32
    bf16 = jnp.bfloat16

    txs = txs_ref[...]                                            # [bb, 1+A+S]
    t = txs[:, 0:1]                                               # raw diffusion step

    # ---- SinusoidalPosEmb: [sin(t*f) || cos(t*f)] == sin(t*f_tiled + phase) ----
    temb = jnp.sin(t * freqs_ref[...] + phase_ref[...])           # [bb, t_dim] f32

    # ---- time_mlp: Linear(t_dim, 2*t_dim) -> Mish ; 2nd Linear folded offline ----
    h = _mish(jnp.dot(temb.astype(bf16), w1_ref[...],
                      preferred_element_type=f32) + b1_ref[...])  # [bb, 2*t_dim] f32

    # ---- cat([x, t, state]) @ Wm1
    #      == [time|x|state] @ Wm1_txs (zero row kills the time column)
    #       + h @ (W2 @ Wm1_t) + (bm1 + b2 @ Wm1_t)
    z = (jnp.dot(txs.astype(bf16), wm1txs_ref[...], preferred_element_type=f32)
         + jnp.dot(h.astype(bf16), w2m1t_ref[...], preferred_element_type=f32)
         + bm1_ref[...])
    z = _mish(z.astype(act_dtype))

    # ---- mid layers 2 & 3 ----
    z = _mish((jnp.dot(z.astype(bf16), wm2_ref[...], preferred_element_type=f32)
               + bm2_ref[...]).astype(act_dtype))
    z = _mish((jnp.dot(z.astype(bf16), wm3_ref[...], preferred_element_type=f32)
               + bm3_ref[...]).astype(act_dtype))

    # ---- final layer (lane-dense, 128-wide padded output) ----
    o_ref[...] = (jnp.dot(z.astype(bf16), wf_ref[...], preferred_element_type=f32)
                  + bf_ref[...]).astype(o_ref.dtype)


# ----------------------------------------------------------------------------
# Offline parameter preparation (folds, splits, padding, bf16 casts) — done once.
# ----------------------------------------------------------------------------
def prepare_params(params, *, action_dim, t_dim=16, out_pad=OUT_PAD):
    f32, bf16 = jnp.float32, jnp.bfloat16

    half = t_dim // 2
    emb = math.log(10000.0) / (half - 1)
    freqs = jnp.exp(jnp.arange(half, dtype=f32) * -emb)
    freqs2 = jnp.tile(freqs, 2)[None, :]                                  # [1, t_dim]
    phase = jnp.concatenate(
        [jnp.zeros((half,), f32), jnp.full((half,), jnp.pi / 2, f32)])[None, :]

    wm1 = params["wm1"].astype(f32)            # [A + t_dim + S, 256]; cat order [x, t, state]
    wm1_x = wm1[:action_dim]
    wm1_t = wm1[action_dim:action_dim + t_dim]
    wm1_s = wm1[action_dim + t_dim:]
    # Prepend a zero row so the raw-time column of [time|x|state] is ignored.
    wm1_txs = jnp.concatenate(
        [jnp.zeros((1, wm1.shape[1]), f32), wm1_x, wm1_s], axis=0)        # [1+A+S, 256]
    w2_m1t = params["w2"].astype(f32) @ wm1_t                             # [2*t_dim, 256]
    bm1c = params["bm1"].astype(f32) + params["b2"].astype(f32) @ wm1_t   # [256]

    # Lane-dense final layer: pad the action_dim-wide output to out_pad (=128) columns.
    wf = params["wf"].astype(f32)
    bf = params["bf"].astype(f32)
    wf_pad = jnp.zeros((wf.shape[0], out_pad), f32).at[:, :wf.shape[1]].set(wf)
    bf_pad = jnp.zeros((out_pad,), f32).at[:bf.shape[0]].set(bf)

    return dict(
        freqs2=freqs2, phase=phase,
        w1=params["w1"].astype(bf16), b1=params["b1"][None, :].astype(f32),
        wm1_txs=wm1_txs.astype(bf16), w2_m1t=w2_m1t.astype(bf16),
        bm1c=bm1c[None, :],
        wm2=params["wm2"].astype(bf16), bm2=params["bm2"][None, :].astype(f32),
        wm3=params["wm3"].astype(bf16), bm3=params["bm3"][None, :].astype(f32),
        wf_pad=wf_pad.astype(bf16), bf_pad=bf_pad[None, :],
    )


def _bf16_elementwise_ok():
    """bf16 Mish/activation chain only where the VPU/EUP are bf16-capable (v6e+)."""
    try:
        kind = jax.devices()[0].device_kind.lower()
    except Exception:
        return True
    return not any(v in kind for v in ("v2", "v3", "v4", "v5"))


# ----------------------------------------------------------------------------
# Wrapper
# ----------------------------------------------------------------------------
def timemlp_forward(x, time, state, prepared, *, batch_block=None):
    B, action_dim = x.shape
    f32 = jnp.float32

    # Single merged batch operand: [time | x | state].
    txs = jnp.concatenate(
        [time.astype(f32).reshape(B, 1), x.astype(f32), state.astype(f32)], axis=1)
    F = txs.shape[1]

    const_ops = (
        prepared["freqs2"], prepared["phase"],
        prepared["w1"], prepared["b1"],
        prepared["wm1_txs"], prepared["w2_m1t"], prepared["bm1c"],
        prepared["wm2"], prepared["bm2"],
        prepared["wm3"], prepared["bm3"],
        prepared["wf_pad"], prepared["bf_pad"],
    )

    act_dtype = jnp.bfloat16 if _bf16_elementwise_ok() else jnp.float32
    kernel = functools.partial(timemlp_kernel, act_dtype=act_dtype)

    # Generation-aware blocking:
    #  * v5e / v6e have 1 TensorCore: grid steps are a serial loop (~0.35 us each) that
    #    rivals this tiny MLP's compute, so stay gridless while the batch fits VMEM.
    #  * v7x: dimension_semantics=("parallel",) shards the grid across 2 TCs — give it
    #    an EVEN number of >=2 steps. Auto default: gridless up to 2048 rows, else
    #    1024-row blocks (weights with constant index_maps stay VMEM-resident).
    if batch_block is None:
        batch_block = 0 if B <= 2048 else 1024
    use_grid = bool(batch_block) and batch_block % 8 == 0 and B > batch_block

    if use_grid:
        bb = batch_block
        steps = -(-B // bb)
        if steps % 2 == 1:
            steps += 1                       # even step count so both v7x TCs get work
        Bp = steps * bb
        if Bp != B:                          # hardened non-divisible batch: zero-pad rows
            txs = jnp.pad(txs, ((0, Bp - B), (0, 0)))

        cp_kwargs = dict(dimension_semantics=("parallel",))
        # Rough per-step VMEM budget: double-buffered in/out blocks + live activations.
        est = 2 * bb * (F + OUT_PAD) * 4 + 8 * bb * 256 * 4 + (1 << 20)
        if est > (14 << 20):
            cp_kwargs["vmem_limit_bytes"] = int(min(est, 100 << 20))

        out = pl.pallas_call(
            kernel,
            out_shape=jax.ShapeDtypeStruct((Bp, OUT_PAD), f32),
            grid=(steps,),
            in_specs=[pl.BlockSpec((bb, F), lambda i: (i, 0))]
                     + [pl.BlockSpec(a.shape, lambda i: (0, 0)) for a in const_ops],
            out_specs=pl.BlockSpec((bb, OUT_PAD), lambda i: (i, 0)),
            compiler_params=pltpu.CompilerParams(**cp_kwargs),
        )(txs, *const_ops)
    else:
        vmem = pl.BlockSpec(memory_space=pltpu.MemorySpace.VMEM)
        out = pl.pallas_call(
            kernel,
            out_shape=jax.ShapeDtypeStruct((B, OUT_PAD), f32),
            in_specs=[vmem] * (1 + len(const_ops)),
            out_specs=vmem,
        )(txs, *const_ops)

    return out[:B, :action_dim]


# ----------------------------------------------------------------------------
# Pure-JAX reference (PyTorch-faithful math, f32) for a sanity check.
# ----------------------------------------------------------------------------
def sinusoidal_pos_emb(time, dim):
    half = dim // 2
    emb = math.log(10000.0) / (half - 1)
    freqs = jnp.exp(jnp.arange(half, dtype=jnp.float32) * -emb)
    ang = time.astype(jnp.float32)[:, None] * freqs[None, :]
    return jnp.concatenate([jnp.sin(ang), jnp.cos(ang)], axis=-1)


def timemlp_ref(x, time, state, params, t_dim=16):
    def mish(v):
        return v * jnp.tanh(jax.nn.softplus(v))

    temb = sinusoidal_pos_emb(time, t_dim)
    h = mish(temb @ params["w1"] + params["b1"])
    t = h @ params["w2"] + params["b2"]
    z = jnp.concatenate([x, t, state], axis=1)
    z = mish(z @ params["wm1"] + params["bm1"])
    z = mish(z @ params["wm2"] + params["bm2"])
    z = mish(z @ params["wm3"] + params["bm3"])
    return z @ params["wf"] + params["bf"]


# ----------------------------------------------------------------------------
# Deterministic parameter init (synthetic, PyTorch Linear-style layout).
# ----------------------------------------------------------------------------
def init_params(key, state_dim, action_dim, t_dim=16, hidden=256):
    keys = jax.random.split(key, 12)

    def lin(kw, kb, fan_in, fan_out):
        bound = 1.0 / math.sqrt(fan_in)
        w = jax.random.uniform(kw, (fan_in, fan_out), jnp.float32, -bound, bound)
        b = jax.random.uniform(kb, (fan_out,), jnp.float32, -bound, bound)
        return w, b

    input_dim = state_dim + action_dim + t_dim
    w1, b1 = lin(keys[0], keys[1], t_dim, 2 * t_dim)
    w2, b2 = lin(keys[2], keys[3], 2 * t_dim, t_dim)
    wm1, bm1 = lin(keys[4], keys[5], input_dim, hidden)
    wm2, bm2 = lin(keys[6], keys[7], hidden, hidden)
    wm3, bm3 = lin(keys[8], keys[9], hidden, hidden)
    wf, bf = lin(keys[10], keys[11], hidden, action_dim)
    return dict(w1=w1, b1=b1, w2=w2, b2=b2, wm1=wm1, bm1=bm1,
                wm2=wm2, bm2=bm2, wm3=wm3, bm3=bm3, wf=wf, bf=bf)


if __name__ == "__main__":
    state_dim, action_dim, t_dim = 11, 3, 16

    key = jax.random.PRNGKey(0)
    k_p, k_x, k_t, k_s = jax.random.split(key, 4)
    params = init_params(k_p, state_dim, action_dim, t_dim)
    prepared = prepare_params(params, action_dim=action_dim, t_dim=t_dim)

    fwd = jax.jit(timemlp_forward, static_argnames=("batch_block",))

    # --- Case 1: small batch -> gridless, whole batch + weights resident in VMEM ---
    B = 4
    x = jax.random.normal(k_x, (B, action_dim), jnp.float32)           # noisy action
    time = jax.random.randint(k_t, (B,), 0, 5).astype(jnp.float32)     # diffusion timestep
    state = jax.random.normal(k_s, (B, state_dim), jnp.float32)

    out = jax.block_until_ready(fwd(x, time, state, prepared))
    ref = timemlp_ref(x, time, state, params, t_dim)
    assert out.shape == (B, action_dim)
    # bf16 weights/activations + approx reciprocal in Mish -> loosened tolerance.
    assert jnp.allclose(out, ref, atol=3e-2, rtol=3e-2), (
        f"max abs diff {jnp.max(jnp.abs(out - ref))}"
    )

    # --- Case 2: explicit batch grid, non-divisible B (pads rows, even step count) ---
    B2 = 300
    k_x2, k_t2, k_s2 = jax.random.split(jax.random.PRNGKey(1), 3)
    x2 = jax.random.normal(k_x2, (B2, action_dim), jnp.float32)
    time2 = jax.random.randint(k_t2, (B2,), 0, 5).astype(jnp.float32)
    state2 = jax.random.normal(k_s2, (B2, state_dim), jnp.float32)

    out2 = jax.block_until_ready(fwd(x2, time2, state2, prepared, batch_block=128))
    ref2 = timemlp_ref(x2, time2, state2, params, t_dim)
    assert out2.shape == (B2, action_dim)
    assert jnp.allclose(out2, ref2, atol=3e-2, rtol=3e-2), (
        f"max abs diff {jnp.max(jnp.abs(out2 - ref2))}"
    )

    print("KERNEL_OK")
</pallas_src>

<mosaic_0001>
module attributes {stable_mosaic.version = 11 : i64} {
  func.func @timemlp_kernel(%arg0: memref<4x15xf32, #tpu.memory_space<vmem>>, %arg1: memref<1x16xf32, #tpu.memory_space<vmem>>, %arg2: memref<1x16xf32, #tpu.memory_space<vmem>>, %arg3: memref<16x32xbf16, #tpu.memory_space<vmem>>, %arg4: memref<1x32xf32, #tpu.memory_space<vmem>>, %arg5: memref<15x256xbf16, #tpu.memory_space<vmem>>, %arg6: memref<32x256xbf16, #tpu.memory_space<vmem>>, %arg7: memref<1x256xf32, #tpu.memory_space<vmem>>, %arg8: memref<256x256xbf16, #tpu.memory_space<vmem>>, %arg9: memref<1x256xf32, #tpu.memory_space<vmem>>, %arg10: memref<256x256xbf16, #tpu.memory_space<vmem>>, %arg11: memref<1x256xf32, #tpu.memory_space<vmem>>, %arg12: memref<256x128xbf16, #tpu.memory_space<vmem>>, %arg13: memref<1x128xf32, #tpu.memory_space<vmem>>, %arg14: memref<4x128xf32, #tpu.memory_space<vmem>>) attributes {dimension_semantics = [], scalar_prefetch = 0 : i64, scratch_operands = 0 : i64, tpu.core_type = #tpu.core_type<tc>} {
    %c0 = arith.constant 0 : index
    %c0_0 = arith.constant 0 : index
    %0 = vector.load %arg0[%c0, %c0_0] : memref<4x15xf32, #tpu.memory_space<vmem>>, vector<4x15xf32>
    %1 = vector.extract_strided_slice %0 {offsets = [0, 0], sizes = [4, 1], strides = [1, 1]} : vector<4x15xf32> to vector<4x1xf32>
    %c0_1 = arith.constant 0 : index
    %c0_2 = arith.constant 0 : index
    %2 = vector.load %arg1[%c0_1, %c0_2] : memref<1x16xf32, #tpu.memory_space<vmem>>, vector<1x16xf32>
    %3 = vector.broadcast %1 : vector<4x1xf32> to vector<4x16xf32>
    %4 = vector.broadcast %2 : vector<1x16xf32> to vector<4x16xf32>
    %5 = arith.mulf %3, %4 : vector<4x16xf32>
    %c0_3 = arith.constant 0 : index
    %c0_4 = arith.constant 0 : index
    %6 = vector.load %arg2[%c0_3, %c0_4] : memref<1x16xf32, #tpu.memory_space<vmem>>, vector<1x16xf32>
    %7 = vector.broadcast %6 : vector<1x16xf32> to vector<4x16xf32>
    %8 = arith.addf %5, %7 : vector<4x16xf32>
    %9 = math.sin %8 : vector<4x16xf32>
    %10 = arith.truncf %9 : vector<4x16xf32> to vector<4x16xbf16>
    %c0_5 = arith.constant 0 : index
    %c0_6 = arith.constant 0 : index
    %11 = vector.load %arg3[%c0_5, %c0_6] : memref<16x32xbf16, #tpu.memory_space<vmem>>, vector<16x32xbf16>
    %cst = arith.constant dense<0.000000e+00> : vector<4x32xf32>
    %12 = tpu.matmul %10, %11, %cst {dimension_numbers = #tpu.dot_dimension_numbers<[1], [0], [0], [1], [0, 0, 1, 1], [], []>} : vector<4x16xbf16>, vector<16x32xbf16>, vector<4x32xf32> -> vector<4x32xf32>
    %c0_7 = arith.constant 0 : index
    %c0_8 = arith.constant 0 : index
    %13 = vector.load %arg4[%c0_7, %c0_8] : memref<1x32xf32, #tpu.memory_space<vmem>>, vector<1x32xf32>
    %14 = vector.broadcast %13 : vector<1x32xf32> to vector<4x32xf32>
    %15 = arith.addf %12, %14 : vector<4x32xf32>
    %cst_9 = arith.constant 2.000000e+01 : f32
    %16 = vector.broadcast %cst_9 : f32 to vector<4x32xf32>
    %17 = arith.minimumf %15, %16 : vector<4x32xf32>
    %18 = math.exp %17 : vector<4x32xf32>
    %cst_10 = arith.constant 2.000000e+00 : f32
    %19 = vector.broadcast %cst_10 : f32 to vector<4x32xf32>
    %20 = arith.addf %18, %19 : vector<4x32xf32>
    %21 = arith.mulf %18, %20 : vector<4x32xf32>
    %22 = arith.mulf %15, %21 : vector<4x32xf32>
    %cst_11 = arith.constant 2.000000e+00 : f32
    %23 = vector.broadcast %cst_11 : f32 to vector<4x32xf32>
    %24 = arith.addf %21, %23 : vector<4x32xf32>
    %25 = tpu.reciprocal %24 {approx = true} : vector<4x32xf32> -> vector<4x32xf32>
    %26 = arith.mulf %22, %25 : vector<4x32xf32>
    %cst_12 = arith.constant 2.000000e+01 : f32
    %27 = vector.broadcast %cst_12 : f32 to vector<4x32xf32>
    %28 = arith.cmpf ogt, %15, %27 : vector<4x32xf32>
    %29 = arith.select %28, %15, %26 : vector<4x32xi1>, vector<4x32xf32>
    %30 = arith.truncf %0 : vector<4x15xf32> to vector<4x15xbf16>
    %c0_13 = arith.constant 0 : index
    %c0_14 = arith.constant 0 : index
    %31 = vector.load %arg5[%c0_13, %c0_14] : memref<15x256xbf16, #tpu.memory_space<vmem>>, vector<15x256xbf16>
    %cst_15 = arith.constant dense<0.000000e+00> : vector<4x256xf32>
    %32 = tpu.matmul %30, %31, %cst_15 {dimension_numbers = #tpu.dot_dimension_numbers<[1], [0], [0], [1], [0, 0, 1, 1], [], []>} : vector<4x15xbf16>, vector<15x256xbf16>, vector<4x256xf32> -> vector<4x256xf32>
    %33 = arith.truncf %29 : vector<4x32xf32> to vector<4x32xbf16>
    %c0_16 = arith.constant 0 : index
    %c0_17 = arith.constant 0 : index
    %34 = vector.load %arg6[%c0_16, %c0_17] : memref<32x256xbf16, #tpu.memory_space<vmem>>, vector<32x256xbf16>
    %cst_18 = arith.constant dense<0.000000e+00> : vector<4x256xf32>
    %35 = tpu.matmul %33, %34, %cst_18 {dimension_numbers = #tpu.dot_dimension_numbers<[1], [0], [0], [1], [0, 0, 1, 1], [], []>} : vector<4x32xbf16>, vector<32x256xbf16>, vector<4x256xf32> -> vector<4x256xf32>
    %36 = arith.addf %32, %35 : vector<4x256xf32>
    %c0_19 = arith.constant 0 : index
    %c0_20 = arith.constant 0 : index
    %37 = vector.load %arg7[%c0_19, %c0_20] : memref<1x256xf32, #tpu.memory_space<vmem>>, vector<1x256xf32>
    %38 = vector.broadcast %37 : vector<1x256xf32> to vector<4x256xf32>
    %39 = arith.addf %36, %38 : vector<4x256xf32>
    %40 = arith.truncf %39 : vector<4x256xf32> to vector<4x256xbf16>
    %cst_21 = arith.constant 2.000000e+01 : bf16
    %41 = vector.broadcast %cst_21 : bf16 to vector<4x256xbf16>
    %42 = arith.minimumf %40, %41 : vector<4x256xbf16>
    %43 = math.exp %42 : vector<4x256xbf16>
    %cst_22 = arith.constant 2.000000e+00 : bf16
    %44 = vector.broadcast %cst_22 : bf16 to vector<4x256xbf16>
    %45 = arith.addf %43, %44 : vector<4x256xbf16>
    %46 = arith.mulf %43, %45 : vector<4x256xbf16>
    %47 = arith.mulf %40, %46 : vector<4x256xbf16>
    %cst_23 = arith.constant 2.000000e+00 : bf16
    %48 = vector.broadcast %cst_23 : bf16 to vector<4x256xbf16>
    %49 = arith.addf %46, %48 : vector<4x256xbf16>
    %50 = arith.divf %47, %49 : vector<4x256xbf16>
    %cst_24 = arith.constant 2.000000e+01 : bf16
    %51 = vector.broadcast %cst_24 : bf16 to vector<4x256xbf16>
    %52 = arith.cmpf ogt, %40, %51 : vector<4x256xbf16>
    %53 = arith.select %52, %40, %50 : vector<4x256xi1>, vector<4x256xbf16>
    %c0_25 = arith.constant 0 : index
    %c0_26 = arith.constant 0 : index
    %54 = vector.load %arg8[%c0_25, %c0_26] : memref<256x256xbf16, #tpu.memory_space<vmem>>, vector<256x256xbf16>
    %cst_27 = arith.constant dense<0.000000e+00> : vector<4x256xf32>
    %55 = tpu.matmul %53, %54, %cst_27 {dimension_numbers = #tpu.dot_dimension_numbers<[1], [0], [0], [1], [0, 0, 1, 1], [], []>} : vector<4x256xbf16>, vector<256x256xbf16>, vector<4x256xf32> -> vector<4x256xf32>
    %c0_28 = arith.constant 0 : index
    %c0_29 = arith.constant 0 : index
    %56 = vector.load %arg9[%c0_28, %c0_29] : memref<1x256xf32, #tpu.memory_space<vmem>>, vector<1x256xf32>
    %57 = vector.broadcast %56 : vector<1x256xf32> to vector<4x256xf32>
    %58 = arith.addf %55, %57 : vector<4x256xf32>
    %59 = arith.truncf %58 : vector<4x256xf32> to vector<4x256xbf16>
    %cst_30 = arith.constant 2.000000e+01 : bf16
    %60 = vector.broadcast %cst_30 : bf16 to vector<4x256xbf16>
    %61 = arith.minimumf %59, %60 : vector<4x256xbf16>
    %62 = math.exp %61 : vector<4x256xbf16>
    %cst_31 = arith.constant 2.000000e+00 : bf16
    %63 = vector.broadcast %cst_31 : bf16 to vector<4x256xbf16>
    %64 = arith.addf %62, %63 : vector<4x256xbf16>
    %65 = arith.mulf %62, %64 : vector<4x256xbf16>
    %66 = arith.mulf %59, %65 : vector<4x256xbf16>
    %cst_32 = arith.constant 2.000000e+00 : bf16
    %67 = vector.broadcast %cst_32 : bf16 to vector<4x256xbf16>
    %68 = arith.addf %65, %67 : vector<4x256xbf16>
    %69 = arith.divf %66, %68 : vector<4x256xbf16>
    %cst_33 = arith.constant 2.000000e+01 : bf16
    %70 = vector.broadcast %cst_33 : bf16 to vector<4x256xbf16>
    %71 = arith.cmpf ogt, %59, %70 : vector<4x256xbf16>
    %72 = arith.select %71, %59, %69 : vector<4x256xi1>, vector<4x256xbf16>
    %c0_34 = arith.constant 0 : index
    %c0_35 = arith.constant 0 : index
    %73 = vector.load %arg10[%c0_34, %c0_35] : memref<256x256xbf16, #tpu.memory_space<vmem>>, vector<256x256xbf16>
    %cst_36 = arith.constant dense<0.000000e+00> : vector<4x256xf32>
    %74 = tpu.matmul %72, %73, %cst_36 {dimension_numbers = #tpu.dot_dimension_numbers<[1], [0], [0], [1], [0, 0, 1, 1], [], []>} : vector<4x256xbf16>, vector<256x256xbf16>, vector<4x256xf32> -> vector<4x256xf32>
    %c0_37 = arith.constant 0 : index
    %c0_38 = arith.constant 0 : index
    %75 = vector.load %arg11[%c0_37, %c0_38] : memref<1x256xf32, #tpu.memory_space<vmem>>, vector<1x256xf32>
    %76 = vector.broadcast %75 : vector<1x256xf32> to vector<4x256xf32>
    %77 = arith.addf %74, %76 : vector<4x256xf32>
    %78 = arith.truncf %77 : vector<4x256xf32> to vector<4x256xbf16>
    %cst_39 = arith.constant 2.000000e+01 : bf16
    %79 = vector.broadcast %cst_39 : bf16 to vector<4x256xbf16>
    %80 = arith.minimumf %78, %79 : vector<4x256xbf16>
    %81 = math.exp %80 : vector<4x256xbf16>
    %cst_40 = arith.constant 2.000000e+00 : bf16
    %82 = vector.broadcast %cst_40 : bf16 to vector<4x256xbf16>
    %83 = arith.addf %81, %82 : vector<4x256xbf16>
    %84 = arith.mulf %81, %83 : vector<4x256xbf16>
    %85 = arith.mulf %78, %84 : vector<4x256xbf16>
    %cst_41 = arith.constant 2.000000e+00 : bf16
    %86 = vector.broadcast %cst_41 : bf16 to vector<4x256xbf16>
    %87 = arith.addf %84, %86 : vector<4x256xbf16>
    %88 = arith.divf %85, %87 : vector<4x256xbf16>
    %cst_42 = arith.constant 2.000000e+01 : bf16
    %89 = vector.broadcast %cst_42 : bf16 to vector<4x256xbf16>
    %90 = arith.cmpf ogt, %78, %89 : vector<4x256xbf16>
    %91 = arith.select %90, %78, %88 : vector<4x256xi1>, vector<4x256xbf16>
    %c0_43 = arith.constant 0 : index
    %c0_44 = arith.constant 0 : index
    %92 = vector.load %arg12[%c0_43, %c0_44] : memref<256x128xbf16, #tpu.memory_space<vmem>>, vector<256x128xbf16>
    %cst_45 = arith.constant dense<0.000000e+00> : vector<4x128xf32>
    %93 = tpu.matmul %91, %92, %cst_45 {dimension_numbers = #tpu.dot_dimension_numbers<[1], [0], [0], [1], [0, 0, 1, 1], [], []>} : vector<4x256xbf16>, vector<256x128xbf16>, vector<4x128xf32> -> vector<4x128xf32>
    %c0_46 = arith.constant 0 : index
    %c0_47 = arith.constant 0 : index
    %94 = vector.load %arg13[%c0_46, %c0_47] : memref<1x128xf32, #tpu.memory_space<vmem>>, vector<1x128xf32>
    %95 = vector.broadcast %94 : vector<1x128xf32> to vector<4x128xf32>
    %96 = arith.addf %93, %95 : vector<4x128xf32>
    %c0_48 = arith.constant 0 : index
    %c0_49 = arith.constant 0 : index
    %97 = vector.load %arg14[%c0_48, %c0_49] : memref<4x128xf32, #tpu.memory_space<vmem>>, vector<4x128xf32>
    tpu.vector_store %arg14[%c0_48, %c0_49], %96 {strides = array<i32>} : memref<4x128xf32, #tpu.memory_space<vmem>>, vector<4x128xf32>,
    return
  }
}

</mosaic_0001>

<llo_original>
// kernel: timemlp_forward.1
$region0: #{timemlp_forward.1}
  #allocation0 [shape = 'u32[]', space=smem, size = 0x4, offset = 0x4, fixed_abs, tag = 'smem constant byte address 0x4 - core index']
  #allocation1 [shape = 'u32[144,128]{1,0:T(1,128)}', space=vmem, size = 0x12000, scoped, tag = 'internal scratch']
  %s0 = inlined_call_operand.vmem [shape: f32[4,15], index: 0, kind: input, shape index: {}]
  %s1 = inlined_call_operand.hbm [shape: f32[1,16], index: 1, kind: input, shape index: {}]
  %s2 = inlined_call_operand.hbm [shape: f32[1,16], index: 2, kind: input, shape index: {}]
  %s3 = inlined_call_operand.vmem [shape: bf16[16,32], index: 3, kind: input, shape index: {}]
  %s4 = inlined_call_operand.hbm [shape: f32[1,32], index: 4, kind: input, shape index: {}]
  %s5 = inlined_call_operand.vmem [shape: bf16[15,256], index: 5, kind: input, shape index: {}]
  %s6 = inlined_call_operand.vmem [shape: bf16[32,256], index: 6, kind: input, shape index: {}]
  %s7 = inlined_call_operand.vmem [shape: f32[1,256], index: 7, kind: input, shape index: {}]
  %s8 = inlined_call_operand.hbm [shape: bf16[256,256], index: 8, kind: input, shape index: {}]
  %s9 = inlined_call_operand.vmem [shape: f32[1,256], index: 9, kind: input, shape index: {}]
  %s10 = inlined_call_operand.hbm [shape: bf16[256,256], index: 10, kind: input, shape index: {}]
  %s11 = inlined_call_operand.vmem [shape: f32[1,256], index: 11, kind: input, shape index: {}]
  %s12 = inlined_call_operand.hbm [shape: bf16[256,128], index: 12, kind: input, shape index: {}]
  %s13 = inlined_call_operand.hbm [shape: f32[1,128], index: 13, kind: input, shape index: {}]
  %s14 = inlined_call_operand.hbm [shape: f32[4,128], index: 14, kind: output, shape index: {}]
  %s15 = sld [smem:[#allocation0]]
  $region94: #{timemlp_forward.1} parent=0
    _
  %s17 = ssub.s32 1, %s15
  %s18 = scalar_select 0, %s17, %s15
  $region1: #{timemlp_forward.1} parent=0
    #allocation2 [shape = 'u8[512]{0}', space=vmem, size = 0x400, scoped, tag = 'input window, operand 1, single buffered']
    #allocation3 [shape = 's32[1]{0}', space=sflag, size = 0x4, scoped, tag = 'scoped memory for timemlp_forward.1']
    #allocation4 [shape = 's32[1]{0}', space=sflag, size = 0x4, scoped, tag = 'scoped memory for timemlp_forward.1']
    #allocation5 [shape = 'u8[512]{0}', space=vmem, size = 0x400, scoped, tag = 'input window, operand 2, single buffered']
    #allocation6 [shape = 's32[1]{0}', space=sflag, size = 0x4, scoped, tag = 'scoped memory for timemlp_forward.1']
    #allocation7 [shape = 'u8[512]{0}', space=vmem, size = 0x400, scoped, tag = 'input window, operand 4, single buffered']
    #allocation8 [shape = 'u8[131072]{0}', space=vmem, size = 0x20000, scoped, tag = 'input window, operand 8, single buffered']
    #allocation9 [shape = 's32[1]{0}', space=sflag, size = 0x4, scoped, tag = 'scoped memory for timemlp_forward.1']
    #allocation10 [shape = 'u8[131072]{0}', space=vmem, size = 0x20000, scoped, tag = 'input window, operand 10, single buffered']
    #allocation11 [shape = 'u8[65536]{0}', space=vmem, size = 0x10000, scoped, tag = 'input window, operand 12, single buffered']
    #allocation12 [shape = 's32[1]{0}', space=sflag, size = 0x4, scoped, tag = 'scoped memory for timemlp_forward.1']
    #allocation13 [shape = 'u8[512]{0}', space=vmem, size = 0x400, scoped, tag = 'input window, operand 13, single buffered']
    #allocation14 [shape = 'u8[2048]{0}', space=vmem, size = 0x800, scoped, tag = 'output window, operand 0, single buffered']
    %19 = vsyncpa [#allocation3], 0
    %20 = vsyncpa [#allocation6], 0
    %21 = vsyncpa [#allocation9], 0
    %22 = vsyncpa [#allocation12], 0
    %23 = vsyncpa [#allocation4], 0
    // Predicated region
    $region2: #{timemlp_forward.1} parent=1 // pred_check
      _
    $region3: #{timemlp_forward.1} parent=1 // pred_check_branch
      %25 = sbr.rel (0) target = $region5
    $region4: #{timemlp_forward.1} parent=1 // pred_region
      _
    $region5: #{timemlp_forward.1} parent=1 // pred_fallthru
      _
    // Predicated region
    $region6: #{timemlp_forward.1} parent=1 // pred_check
      _
    $region7: #{timemlp_forward.1} parent=1 // pred_check_branch
      %27 = sbr.rel (0) target = $region9
    $region8: #{timemlp_forward.1} parent=1 // pred_region
      %s29 = ssub.s32 16, 16
      %30 = vsyncadd [#allocation3], %s29
      %s32 = sshll.u32 [#allocation2], 4
      %s33 = int_to_ptr.vmem [resolvable:$true] %s32
      %35 = dma.hbm_to_vmem [thread:$0]  %s1, 16, %s33, [#allocation3]
    $region9: #{timemlp_forward.1} parent=1 // pred_fallthru
      _
    // Predicated region
    $region10: #{timemlp_forward.1} parent=1 // pred_check
      _
    $region11: #{timemlp_forward.1} parent=1 // pred_check_branch
      %37 = sbr.rel (0) target = $region13
    $region12: #{timemlp_forward.1} parent=1 // pred_region
      %s39 = ssub.s32 16, 16
      %40 = vsyncadd [#allocation6], %s39
      %s42 = sshll.u32 [#allocation5], 4
      %s43 = int_to_ptr.vmem [resolvable:$true] %s42
      %45 = dma.hbm_to_vmem [thread:$0]  %s2, 16, %s43, [#allocation6]
    $region13: #{timemlp_forward.1} parent=1 // pred_fallthru
      _
    // Predicated region
    $region14: #{timemlp_forward.1} parent=1 // pred_check
      _
    $region15: #{timemlp_forward.1} parent=1 // pred_check_branch
      %47 = sbr.rel (0) target = $region17
    $region16: #{timemlp_forward.1} parent=1 // pred_region
      _
    $region17: #{timemlp_forward.1} parent=1 // pred_fallthru
      _
    // Predicated region
    $region18: #{timemlp_forward.1} parent=1 // pred_check
      _
    $region19: #{timemlp_forward.1} parent=1 // pred_check_branch
      %49 = sbr.rel (0) target = $region21
    $region20: #{timemlp_forward.1} parent=1 // pred_region
      %s51 = ssub.s32 16, 16
      %52 = vsyncadd [#allocation6], %s51
      %s54 = sshll.u32 [#allocation7], 4
      %s55 = int_to_ptr.vmem [resolvable:$true] %s54
      %57 = dma.hbm_to_vmem [thread:$0]  %s4, 16, %s55, [#allocation6]
    $region21: #{timemlp_forward.1} parent=1 // pred_fallthru
      _
    // Predicated region
    $region22: #{timemlp_forward.1} parent=1 // pred_check
      _
    $region23: #{timemlp_forward.1} parent=1 // pred_check_branch
      %59 = sbr.rel (0) target = $region25
    $region24: #{timemlp_forward.1} parent=1 // pred_region
      _
    $region25: #{timemlp_forward.1} parent=1 // pred_fallthru
      _
    // Predicated region
    $region26: #{timemlp_forward.1} parent=1 // pred_check
      _
    $region27: #{timemlp_forward.1} parent=1 // pred_check_branch
      %61 = sbr.rel (0) target = $region29
    $region28: #{timemlp_forward.1} parent=1 // pred_region
      _
    $region29: #{timemlp_forward.1} parent=1 // pred_fallthru
      _
    // Predicated region
    $region30: #{timemlp_forward.1} parent=1 // pred_check
      _
    $region31: #{timemlp_forward.1} parent=1 // pred_check_branch
      %63 = sbr.rel (0) target = $region33
    $region32: #{timemlp_forward.1} parent=1 // pred_region
      _
    $region33: #{timemlp_forward.1} parent=1 // pred_fallthru
      _
    // Predicated region
    $region34: #{timemlp_forward.1} parent=1 // pred_check
      _
    $region35: #{timemlp_forward.1} parent=1 // pred_check_branch
      %65 = sbr.rel (0) target = $region37
    $region36: #{timemlp_forward.1} parent=1 // pred_region
      %s67 = ssub.s32 4096, 4096
      %68 = vsyncadd [#allocation9], %s67
      %s69 = sshll.u32 [#allocation8], 4
      %s70 = int_to_ptr.vmem [resolvable:$true] %s69
      %75 = dma.hbm_to_vmem [thread:$0]  %s8, 4096, %s70, [#allocation9], 128, 128, 8
    $region37: #{timemlp_forward.1} parent=1 // pred_fallthru
      _
    // Predicated region
    $region38: #{timemlp_forward.1} parent=1 // pred_check
      _
    $region39: #{timemlp_forward.1} parent=1 // pred_check_branch
      %77 = sbr.rel (0) target = $region41
    $region40: #{timemlp_forward.1} parent=1 // pred_region
      _
    $region41: #{timemlp_forward.1} parent=1 // pred_fallthru
      _
    // Predicated region
    $region42: #{timemlp_forward.1} parent=1 // pred_check
      _
    $region43: #{timemlp_forward.1} parent=1 // pred_check_branch
      %79 = sbr.rel (0) target = $region45
    $region44: #{timemlp_forward.1} parent=1 // pred_region
      %s81 = ssub.s32 4096, 4096
      %82 = vsyncadd [#allocation9], %s81
      %s83 = sshll.u32 [#allocation10], 4
      %s84 = int_to_ptr.vmem [resolvable:$true] %s83
      %89 = dma.hbm_to_vmem [thread:$0]  %s10, 4096, %s84, [#allocation9], 128, 128, 8
    $region45: #{timemlp_forward.1} parent=1 // pred_fallthru
      _
    // Predicated region
    $region46: #{timemlp_forward.1} parent=1 // pred_check
      _
    $region47: #{timemlp_forward.1} parent=1 // pred_check_branch
      %91 = sbr.rel (0) target = $region49
    $region48: #{timemlp_forward.1} parent=1 // pred_region
      _
    $region49: #{timemlp_forward.1} parent=1 // pred_fallthru
      _
    // Predicated region
    $region50: #{timemlp_forward.1} parent=1 // pred_check
      _
    $region51: #{timemlp_forward.1} parent=1 // pred_check_branch
      %93 = sbr.rel (0) target = $region53
    $region52: #{timemlp_forward.1} parent=1 // pred_region
      %s95 = ssub.s32 2048, 2048
      %96 = vsyncadd [#allocation12], %s95
      %s97 = sshll.u32 [#allocation11], 4
      %s98 = int_to_ptr.vmem [resolvable:$true] %s97
      %103 = dma.hbm_to_vmem [thread:$0]  %s12, 2048, %s98, [#allocation12], 64, 64, 4
    $region53: #{timemlp_forward.1} parent=1 // pred_fallthru
      _
    // Predicated region
    $region54: #{timemlp_forward.1} parent=1 // pred_check
      _
    $region55: #{timemlp_forward.1} parent=1 // pred_check_branch
      %105 = sbr.rel (0) target = $region57
    $region56: #{timemlp_forward.1} parent=1 // pred_region
      %s107 = ssub.s32 16, 16
      %108 = vsyncadd [#allocation12], %s107
      %s110 = sshll.u32 [#allocation13], 4
      %s111 = int_to_ptr.vmem [resolvable:$true] %s110
      %113 = dma.hbm_to_vmem [thread:$0]  %s13, 16, %s111, [#allocation12]
    $region57: #{timemlp_forward.1} parent=1 // pred_fallthru
      _
    // Predicated region
    $region58: #{timemlp_forward.1} parent=1 // pred_check
      _
    $region59: #{timemlp_forward.1} parent=1 // pred_check_branch
      %115 = sbr.rel (0) target = $region61
    $region60: #{timemlp_forward.1} parent=1 // pred_region
      %116 = dma.done [#allocation3], 16
    $region61: #{timemlp_forward.1} parent=1 // pred_fallthru
      _
    // Predicated region
    $region62: #{timemlp_forward.1} parent=1 // pred_check
      _
    $region63: #{timemlp_forward.1} parent=1 // pred_check_branch
      %118 = sbr.rel (0) target = $region65
    $region64: #{timemlp_forward.1} parent=1 // pred_region
      %119 = dma.done [#allocation6], 16
    $region65: #{timemlp_forward.1} parent=1 // pred_fallthru
      _
    // Predicated region
    $region66: #{timemlp_forward.1} parent=1 // pred_check
      _
    $region67: #{timemlp_forward.1} parent=1 // pred_check_branch
      %121 = sbr.rel (0) target = $region69
    $region68: #{timemlp_forward.1} parent=1 // pred_region
      %122 = dma.done [#allocation6], 16
    $region69: #{timemlp_forward.1} parent=1 // pred_fallthru
      _
    // Predicated region
    $region70: #{timemlp_forward.1} parent=1 // pred_check
      _
    $region71: #{timemlp_forward.1} parent=1 // pred_check_branch
      %124 = sbr.rel (0) target = $region73
    $region72: #{timemlp_forward.1} parent=1 // pred_region
      %125 = dma.done [#allocation9], 4096
    $region73: #{timemlp_forward.1} parent=1 // pred_fallthru
      _
    // Predicated region
    $region74: #{timemlp_forward.1} parent=1 // pred_check
      _
    $region75: #{timemlp_forward.1} parent=1 // pred_check_branch
      %127 = sbr.rel (0) target = $region77
    $region76: #{timemlp_forward.1} parent=1 // pred_region
      %128 = dma.done [#allocation9], 4096
    $region77: #{timemlp_forward.1} parent=1 // pred_fallthru
      _
    // Predicated region
    $region78: #{timemlp_forward.1} parent=1 // pred_check
      _
    $region79: #{timemlp_forward.1} parent=1 // pred_check_branch
      %130 = sbr.rel (0) target = $region81
    $region80: #{timemlp_forward.1} parent=1 // pred_region
      %131 = dma.done [#allocation12], 2048
    $region81: #{timemlp_forward.1} parent=1 // pred_fallthru
      _
    // Predicated region
    $region82: #{timemlp_forward.1} parent=1 // pred_check
      _
    $region83: #{timemlp_forward.1} parent=1 // pred_check_branch
      %133 = sbr.rel (0) target = $region85
    $region84: #{timemlp_forward.1} parent=1 // pred_region
      %134 = dma.done [#allocation12], 16
    $region85: #{timemlp_forward.1} parent=1 // pred_fallthru
      _
    %v138 = vld [vmem:[%s0] sm:$0xf]
    %v139 = vld [vmem:[#allocation2] sm:$0x1]
    %141 = vset.pattern.permute.xlu0 0
    %142 = vperm.xlu0 %141, %v138
    %v143 = vpop.permute.xlu0 %142
    %v146 = vlaneseq
    %v147 = vshrl.u32 %v146, 7
    %v148 = vsub.s32 0, %v147
    %v149 = vrot.slane %v139, %v148
    %v151 = vmul.f32 %v143, %v149
    %v152 = vld [vmem:[#allocation5] sm:$0x1]
    %v154 = vlaneseq
    %v155 = vshrl.u32 %v154, 7
    %v156 = vsub.s32 0, %v155
    %v157 = vrot.slane %v152, %v156
    %v159 = vadd.f32 %v151, %v157
    %v160 = vand.u32 2147483647, %v159
    %vm161 = vcmp.le.f32.partialorder %v160, 0.7853982
    %vm162 = vcmp.lt.s32.totalorder %v159, 0
    %v163 = vand.u32 %v159, 2139095040
    %v164 = vshrl.u32 %v163, 23
    %v165 = vsub.s32 %v164, 127
    %v166 = vand.u32 2147483647, %v159
    %v167 = vand.u32 %v166, 8388607
    %v168 = vor.u32 %v167, 8388608
    %v169 = vsub.s32 0, %v168
    %v170 = vadd.s32 %v165, 1
    %vm171 = vcmp.gt.s32.totalorder %v170, 0
    %v172 = vsel %vm171, %v170, 0
    %v173 = vshrl.u32 %v172, 5
    %v174 = vand.u32 %v172, 31
    %v175 = vsub.s32 32, %v174
    %v176 = vshrl.u32 683565275, %v175
    %v177 = vshll.u32 683565275, %v174
    %v178 = vshrl.u32 2475754826, %v175
    %v179 = vor.u32 %v177, %v178
    %v180 = vshll.u32 2475754826, %v174
    %v181 = vshrl.u32 2131351028, %v175
    %v182 = vor.u32 %v180, %v181
    %v183 = vshll.u32 2131351028, %v174
    %v184 = vshrl.u32 2102212464, %v175
    %v185 = vor.u32 %v183, %v184
    %v186 = vshll.u32 2102212464, %v174
    %v187 = vshrl.u32 920167782, %v175
    %v188 = vor.u32 %v186, %v187
    %v189 = vshll.u32 920167782, %v174
    %v190 = vshrl.u32 1326507024, %v175
    %v191 = vor.u32 %v189, %v190
    %vm192 = vcmp.lt.s32.totalorder %v173, 1
    %vm193 = vcmp.lt.s32.totalorder %v173, 2
    %vm194 = vcmp.lt.s32.totalorder %v173, 3
    %vm195 = vcmp.lt.s32.totalorder %v173, 4
    %v196 = vsel %vm192, %v176, %v179
    %v197 = vsel %vm195, %v185, 2102212464
    %v198 = vsel %vm194, %v182, %v197
    %v199 = vsel %vm193, %v196, %v198
    %v200 = vsel %vm192, %v179, %v182
    %v201 = vsel %vm195, %v188, 920167782
    %v202 = vsel %vm194, %v185, %v201
    %v203 = vsel %vm193, %v200, %v202
    %v204 = vsel %vm192, %v182, %v185
    %v205 = vsel %vm195, %v191, 1326507024
    %v206 = vsel %vm194, %v188, %v205
    %v207 = vsel %vm193, %v204, %v206
    %v208 = vshll.u32 %v168, 8
    %v209 = vmul.u32.u64.compose %v208, %v207
    %v210 = vextract.low.u32 %v209
    %v211 = vextract.high.u32 %v209
    %v212 = vmul.u32.u64.compose %v208, %v203
    %v213 = vextract.low.u32 %v212
    %v214 = vextract.high.u32 %v212
    %v215 = vmul.u32 %v208, %v199
    %v216 = vadd.s32 %v211, %v213
    %vm217 = vc.u32 %v211, %v213
    %v218 = vadd.s32 %v214, 1
    %v219 = vsel %vm217, %v218, %v214
    %v220 = vadd.s32 %v215, %v219
    %v221 = vadd.s32 %v220, 536870912
    %v222 = vshrl.u32 %v221, 30
    %v223 = vshll.u32 %v222, 30
    %v224 = vsub.s32 %v220, %v223
    %vm225 = vcmp.lt.s32.totalorder %v224, 0
    %v226 = vsub.s32 0, %v224
    %v227 = vsel %vm225, %v226, %v224
    %v228 = vclz %v227
    %v229 = vsub.s32 %v228, 2
    %vm230 = vcmp.gt.s32.totalorder 0, %v229
    %v231 = vsel %vm230, 0, %v229
    %v232 = vsub.s32 32, %v231
    %v233 = vshll.u32 %v224, %v231
    %v234 = vshrl.u32 %v216, %v232
    %v235 = vor.u32 %v233, %v234
    %v236 = vsub.s32 4294967266, %v231
    %v237 = vadd.s32 %v236, 127
    %v238 = vshll.u32 %v237, 23
    %v239 = vor.u32 4788187, %v238
    %v240 = vand.u32 2147483647, %v239
    %v242 = vcvt.s32.f32 %v235
    %v243 = vmul.f32 %v242, %v240
    %v244 = vxor.u32 %v243, 2147483648
    %v245 = vsel %vm162, %v244, %v243
    %v246 = vsub.s32 4, %v222
    %v247 = vsel %vm162, %v246, %v222
    %v248 = vsel %vm161, %v159, %v245
    %v249 = vsel %vm161, 0, %v247
    %v250 = vcosq.f32.pop %v248
    %v251 = vsinq.f32.pop %v248
    %vm252 = vweird.f32 %v159
    %v253 = vadd.s32 %v249, 3
    %v254 = vand.u32 %v253, 3
    %vm255 = vcmp.lt.s32.totalorder %v254, 2
    %vm256 = vcmp.eq.s32.totalorder %v254, 0
    %v257 = vxor.u32 %v251, 2147483648
    %v258 = vsel %vm256, %v250, %v257
    %vm259 = vcmp.eq.s32.totalorder %v254, 2
    %v260 = vxor.u32 %v250, 2147483648
    %v261 = vsel %vm259, %v260, %v251
    %v262 = vsel %vm255, %v258, %v261
    %v263 = vsel %vm252, nan, %v262
    %v264 = vpack.c.bf16 %v263, %v263
    %v265 = vld [vmem:[%s3] sm:$0xf]
    %v266 = vld [vmem:[%s3 + $0x4] sm:$0xf]
    %v267 = vld [vmem:[#allocation7] sm:$0x1]
    %v269 = vlaneseq
    %v270 = vshrl.u32 %v269, 7
    %v271 = vsub.s32 0, %v270
    %v272 = vrot.slane %v267, %v271
    %v276 = vunpack.c.l.b16 %v265
    %v277 = vunpack.c.l.b16 %v266
    %v278 = vpack.c.b16 %v277, %v276
    %vm280 = vcmask 130048
    %v282 = vsel %vm280, %v264, 0
    %284 = vmatprep.subr.bf16.mxu0 0
    %285 = vmatpush1.bf16.msra.mxu0 %v278
    %286 = vmatprep.subr.bf16.mxu0 0
    %287 = vmatpush1.bf16.msra.mxu0 0
    %288 = vmatprep.subr.bf16.mxu0 0
    %289 = vmatpush1.bf16.msra.mxu0 0
    %290 = vmatprep.subr.bf16.mxu0 0
    %291 = vmatpush1.bf16.msra.mxu0 0
    %292 = vmatprep.subr.bf16.mxu0 0
    %293 = vmatpush1.bf16.msra.mxu0 0
    %294 = vmatprep.subr.bf16.mxu0 0
    %295 = vmatpush1.bf16.msra.mxu0 0
    %296 = vmatprep.subr.bf16.mxu0 0
    %297 = vmatpush1.bf16.msra.mxu0 0
    %298 = vmatprep.subr.bf16.mxu0 0
    %299 = vmatpush1.bf16.msra.mxu0 0
    %300 = vmatprep.subr.bf16.mxu0 0
    %301 = vmatpush1.bf16.msra.mxu0 0
    %302 = vmatprep.subr.bf16.mxu0 0
    %303 = vmatpush1.bf16.msra.mxu0 0
    %304 = vmatprep.subr.bf16.mxu0 0
    %305 = vmatpush1.bf16.msra.mxu0 0
    %306 = vmatprep.subr.bf16.mxu0 0
    %307 = vmatpush1.bf16.msra.mxu0 0
    %308 = vmatprep.subr.bf16.mxu0 0
    %309 = vmatpush1.bf16.msra.mxu0 0
    %310 = vmatprep.subr.bf16.mxu0 0
    %311 = vmatpush1.bf16.msra.mxu0 0
    %312 = vmatprep.subr.bf16.mxu0 0
    %313 = vmatpush1.bf16.msra.mxu0 0
    %314 = vmatprep.subr.bf16.mxu0 0
    %315 = vmatpush1.bf16.msra.mxu0 0
    %316 = vmatprep.mubr.bf16.mxu0 0
    %317 = vmatmul.mubr.bf16.gmra.mrb[0].mxu0 %v282
    %v318 = vpop.f32.mrb[0].mxu0
    %v319 = vadd.f32 %v272, %v318
    %v320 = vpop.f32.mrb[0].mxu0
    %v321 = vpop.f32.mrb[0].mxu0
    %v322 = vpop.f32.mrb[0].mxu0
    %323 = vdwg.mxu0
    %v324 = vmin.f32 %v319, 20.0
    %v325 = vmul.f32 %v324, 1.442695
    %v326 = vpow.pop %v325
    %v327 = vadd.f32 %v326, 2.0
    %v328 = vmul.f32 %v326, %v327
    %v329 = vmul.f32 %v319, %v328
    %v330 = vadd.f32 %v328, 2.0
    %v331 = vrcp.pop %v330
    %v332 = vmul.f32 %v329, %v331
    %vm333 = vcmp.gt.f32.partialorder %v319, 20.0
    %v334 = vsel %vm333, %v319, %v332
    %v335 = vpack.c.bf16 %v138, %v138
    %v336 = vld [vmem:[%s5] sm:$0xff]
    %v337 = vld [vmem:[%s5 + $0x8] sm:$0xff]
    %v338 = vpack.c.bf16 %v334, %v334
    %v339 = vld [vmem:[%s6] sm:$0xff]
    %v340 = vld [vmem:[%s6 + $0x8] sm:$0xff]
    %v341 = vld [vmem:[%s6 + $0x10] sm:$0xff]
    %v342 = vld [vmem:[%s6 + $0x18] sm:$0xff]
    %v347 = vunpack.c.l.b16 %v339
    %v348 = vunpack.c.h.b16 %v339
    %v349 = vunpack.c.l.b16 %v340
    %v350 = vunpack.c.h.b16 %v340
    %v351 = vunpack.c.l.b16 %v341
    %v352 = vunpack.c.h.b16 %v341
    %v353 = vunpack.c.l.b16 %v342
    %v354 = vunpack.c.h.b16 %v342
    %v355 = vpack.c.b16 %v349, %v347
    %v356 = vpack.c.b16 %v350, %v348
    %v357 = vpack.c.b16 %v353, %v351
    %v358 = vpack.c.b16 %v354, %v352
    %vm363 = vcmask 261120
    %v365 = vsel %vm363, %v338, 0
    %367 = vmatprep.subr.bf16.mxu0 %v356
    %368 = vmatpush1.bf16.msra.mxu0 %v355
    %369 = vmatprep.subr.bf16.mxu0 %v358
    %370 = vmatpush1.bf16.msra.mxu0 %v357
    %371 = vmatprep.subr.bf16.mxu0 0
    %372 = vmatpush1.bf16.msra.mxu0 0
    %373 = vmatprep.subr.bf16.mxu0 0
    %374 = vmatpush1.bf16.msra.mxu0 0
    %375 = vmatprep.subr.bf16.mxu0 0
    %376 = vmatpush1.bf16.msra.mxu0 0
    %377 = vmatprep.subr.bf16.mxu0 0
    %378 = vmatpush1.bf16.msra.mxu0 0
    %379 = vmatprep.subr.bf16.mxu0 0
    %380 = vmatpush1.bf16.msra.mxu0 0
    %381 = vmatprep.subr.bf16.mxu0 0
    %382 = vmatpush1.bf16.msra.mxu0 0
    %383 = vmatprep.subr.bf16.mxu0 0
    %384 = vmatpush1.bf16.msra.mxu0 0
    %385 = vmatprep.subr.bf16.mxu0 0
    %386 = vmatpush1.bf16.msra.mxu0 0
    %387 = vmatprep.subr.bf16.mxu0 0
    %388 = vmatpush1.bf16.msra.mxu0 0
    %389 = vmatprep.subr.bf16.mxu0 0
    %390 = vmatpush1.bf16.msra.mxu0 0
    %391 = vmatprep.subr.bf16.mxu0 0
    %392 = vmatpush1.bf16.msra.mxu0 0
    %393 = vmatprep.subr.bf16.mxu0 0
    %394 = vmatpush1.bf16.msra.mxu0 0
    %395 = vmatprep.subr.bf16.mxu0 0
    %396 = vmatpush1.bf16.msra.mxu0 0
    %397 = vmatprep.subr.bf16.mxu0 0
    %398 = vmatpush1.bf16.msra.mxu0 0
    %399 = vmatprep.mubr.bf16.mxu0 0
    %400 = vmatmul.mubr.bf16.gmra.mrb[0].mxu0 %v365
    %v401 = vpop.f32.mrb[0].mxu0
    %v402 = vadd.f32 0.0, %v401
    %v403 = vpop.f32.mrb[0].mxu0
    %v404 = vadd.f32 0.0, %v403
    %v405 = vpop.f32.mrb[0].mxu0
    %v406 = vpop.f32.mrb[0].mxu0
    %407 = vdwg.mxu0
    %v410 = vunpack.c.l.b16 %v336
    %v411 = vunpack.c.h.b16 %v336
    %v412 = vunpack.c.l.b16 %v337
    %v413 = vunpack.c.h.b16 %v337
    %v414 = vpack.c.b16 %v412, %v410
    %v415 = vpack.c.b16 %v413, %v411
    %vm416 = vcmask 121856
    %v418 = vsel %vm416, %v335, 0
    %vm420 = vcmask 1046528
    %vm421 = vcmask 1047552
    %v422 = vsel %vm420, 4294967295, 65535
    %v423 = vsel %vm421, %v422, 0
    %v425 = vand.u32 %v414, %v423
    %v428 = vand.u32 %v415, %v423
    %430 = vmatprep.subr.bf16.mxu0 %v428
    %431 = vmatpush1.bf16.msra.mxu0 %v425
    %432 = vmatprep.subr.bf16.mxu0 0
    %433 = vmatpush1.bf16.msra.mxu0 0
    %434 = vmatprep.subr.bf16.mxu0 0
    %435 = vmatpush1.bf16.msra.mxu0 0
    %436 = vmatprep.subr.bf16.mxu0 0
    %437 = vmatpush1.bf16.msra.mxu0 0
    %438 = vmatprep.subr.bf16.mxu0 0
    %439 = vmatpush1.bf16.msra.mxu0 0
    %440 = vmatprep.subr.bf16.mxu0 0
    %441 = vmatpush1.bf16.msra.mxu0 0
    %442 = vmatprep.subr.bf16.mxu0 0
    %443 = vmatpush1.bf16.msra.mxu0 0
    %444 = vmatprep.subr.bf16.mxu0 0
    %445 = vmatpush1.bf16.msra.mxu0 0
    %446 = vmatprep.subr.bf16.mxu0 0
    %447 = vmatpush1.bf16.msra.mxu0 0
    %448 = vmatprep.subr.bf16.mxu0 0
    %449 = vmatpush1.bf16.msra.mxu0 0
    %450 = vmatprep.subr.bf16.mxu0 0
    %451 = vmatpush1.bf16.msra.mxu0 0
    %452 = vmatprep.subr.bf16.mxu0 0
    %453 = vmatpush1.bf16.msra.mxu0 0
    %454 = vmatprep.subr.bf16.mxu0 0
    %455 = vmatpush1.bf16.msra.mxu0 0
    %456 = vmatprep.subr.bf16.mxu0 0
    %457 = vmatpush1.bf16.msra.mxu0 0
    %458 = vmatprep.subr.bf16.mxu0 0
    %459 = vmatpush1.bf16.msra.mxu0 0
    %460 = vmatprep.subr.bf16.mxu0 0
    %461 = vmatpush1.bf16.msra.mxu0 0
    %462 = vmatprep.mubr.bf16.mxu0 0
    %463 = vmatmul.mubr.bf16.gmra.mrb[0].mxu0 %v418
    %v464 = vpop.f32.mrb[0].mxu0
    %v465 = vadd.f32 %v402, %v464
    %v466 = vpop.f32.mrb[0].mxu0
    %v467 = vadd.f32 %v404, %v466
    %v468 = vpop.f32.mrb[0].mxu0
    %v469 = vpop.f32.mrb[0].mxu0
    %470 = vdwg.mxu0
    %v471 = vld [vmem:[%s7] sm:$0x3]
    %v473 = vlaneseq
    %v474 = vshrl.u32 %v473, 7
    %v475 = vsub.s32 0, %v474
    %v476 = vrot.slane %v471, %v475
    %v477 = vlaneseq
    %v478 = vshrl.u32 %v477, 7
    %v479 = vsub.s32 1, %v478
    %v480 = vrot.slane %v471, %v479
    %v483 = vadd.f32 %v465, %v476
    %v484 = vadd.f32 %v467, %v480
    %v485 = vpack.c.bf16 %v483, %v483
    %v486 = vpack.c.bf16 %v484, %v484
    %v487 = vmin.bf16 %v485, 1101021600
    %v488 = vmin.bf16 %v486, 1101021600
    %v490 = vmul.bf16 %v487, 1069105081
    %v491 = vpow.bf16.pop %v490
    %v493 = vmul.bf16 %v488, 1069105081
    %v494 = vpow.bf16.pop %v493
    %v495 = vadd.bf16 %v491, 1073758208
    %v496 = vadd.bf16 %v494, 1073758208
    %v497 = vmul.bf16 %v491, %v495
    %v498 = vmul.bf16 %v494, %v496
    %v499 = vmul.bf16 %v485, %v497
    %v500 = vmul.bf16 %v486, %v498
    %v501 = vadd.bf16 %v497, 1073758208
    %v502 = vadd.bf16 %v498, 1073758208
    %v503 = vrcp.bf16.pop %v501
    %v504 = vmul.bf16 %v499, %v503
    %v505 = vrcp.bf16.pop %v502
    %v506 = vmul.bf16 %v500, %v505
    %vm507 = vcmp.gt.bf16.partialorder %v485, 1101021600
    %vm508 = vcmp.gt.bf16.partialorder %v486, 1101021600
    %v509 = vsel %vm507, %v485, %v504
    %v510 = vsel %vm508, %v486, %v506
    %v511 = vld [vmem:[#allocation8] sm:$0xff]
    %v512 = vld [vmem:[#allocation8 + $0x8] sm:$0xff]
    %v513 = vld [vmem:[#allocation8 + $0x10] sm:$0xff]
    %v514 = vld [vmem:[#allocation8 + $0x18] sm:$0xff]
    %v515 = vld [vmem:[#allocation8 + $0x20] sm:$0xff]
    %v516 = vld [vmem:[#allocation8 + $0x28] sm:$0xff]
    %v517 = vld [vmem:[#allocation8 + $0x30] sm:$0xff]
    %v518 = vld [vmem:[#allocation8 + $0x38] sm:$0xff]
    %v519 = vld [vmem:[#allocation8 + $0x40] sm:$0xff]
    %v520 = vld [vmem:[#allocation8 + $0x48] sm:$0xff]
    %v521 = vld [vmem:[#allocation8 + $0x50] sm:$0xff]
    %v522 = vld [vmem:[#allocation8 + $0x58] sm:$0xff]
    %v523 = vld [vmem:[#allocation8 + $0x60] sm:$0xff]
    %v524 = vld [vmem:[#allocation8 + $0x68] sm:$0xff]
    %v525 = vld [vmem:[#allocation8 + $0x70] sm:$0xff]
    %v526 = vld [vmem:[#allocation8 + $0x78] sm:$0xff]
    %v527 = vld [vmem:[#allocation8 + $0x80] sm:$0xff]
    %v528 = vld [vmem:[#allocation8 + $0x88] sm:$0xff]
    %v529 = vld [vmem:[#allocation8 + $0x90] sm:$0xff]
    %v530 = vld [vmem:[#allocation8 + $0x98] sm:$0xff]
    %v531 = vld [vmem:[#allocation8 + $0xa0] sm:$0xff]
    %v532 = vld [vmem:[#allocation8 + $0xa8] sm:$0xff]
    %v533 = vld [vmem:[#allocation8 + $0xb0] sm:$0xff]
    %v534 = vld [vmem:[#allocation8 + $0xb8] sm:$0xff]
    %v535 = vld [vmem:[#allocation8 + $0xc0] sm:$0xff]
    %v536 = vld [vmem:[#allocation8 + $0xc8] sm:$0xff]
    %v537 = vld [vmem:[#allocation8 + $0xd0] sm:$0xff]
    %v538 = vld [vmem:[#allocation8 + $0xd8] sm:$0xff]
    %v539 = vld [vmem:[#allocation8 + $0xe0] sm:$0xff]
    %v540 = vld [vmem:[#allocation8 + $0xe8] sm:$0xff]
    %v541 = vld [vmem:[#allocation8 + $0xf0] sm:$0xff]
    %v542 = vld [vmem:[#allocation8 + $0xf8] sm:$0xff]
    %v543 = vld [vmem:[%s9] sm:$0x3]
    %v545 = vlaneseq
    %v546 = vshrl.u32 %v545, 7
    %v547 = vsub.s32 0, %v546
    %v548 = vrot.slane %v543, %v547
    %v549 = vlaneseq
    %v550 = vshrl.u32 %v549, 7
    %v551 = vsub.s32 1, %v550
    %v552 = vrot.slane %v543, %v551
    %v587 = vunpack.c.l.b16 %v511
    %v588 = vunpack.c.h.b16 %v511
    %v589 = vunpack.c.l.b16 %v512
    %v590 = vunpack.c.h.b16 %v512
    %v591 = vunpack.c.l.b16 %v513
    %v592 = vunpack.c.h.b16 %v513
    %v593 = vunpack.c.l.b16 %v514
    %v594 = vunpack.c.h.b16 %v514
    %v595 = vunpack.c.l.b16 %v515
    %v596 = vunpack.c.h.b16 %v515
    %v597 = vunpack.c.l.b16 %v516
    %v598 = vunpack.c.h.b16 %v516
    %v599 = vunpack.c.l.b16 %v517
    %v600 = vunpack.c.h.b16 %v517
    %v601 = vunpack.c.l.b16 %v518
    %v602 = vunpack.c.h.b16 %v518
    %v603 = vunpack.c.l.b16 %v519
    %v604 = vunpack.c.h.b16 %v519
    %v605 = vunpack.c.l.b16 %v520
    %v606 = vunpack.c.h.b16 %v520
    %v607 = vunpack.c.l.b16 %v521
    %v608 = vunpack.c.h.b16 %v521
    %v609 = vunpack.c.l.b16 %v522
    %v610 = vunpack.c.h.b16 %v522
    %v611 = vunpack.c.l.b16 %v523
    %v612 = vunpack.c.h.b16 %v523
    %v613 = vunpack.c.l.b16 %v524
    %v614 = vunpack.c.h.b16 %v524
    %v615 = vunpack.c.l.b16 %v525
    %v616 = vunpack.c.h.b16 %v525
    %v617 = vunpack.c.l.b16 %v526
    %v618 = vunpack.c.h.b16 %v526
    %v619 = vunpack.c.l.b16 %v527
    %v620 = vunpack.c.h.b16 %v527
    %v621 = vunpack.c.l.b16 %v528
    %v622 = vunpack.c.h.b16 %v528
    %v623 = vunpack.c.l.b16 %v529
    %v624 = vunpack.c.h.b16 %v529
    %v625 = vunpack.c.l.b16 %v530
    %v626 = vunpack.c.h.b16 %v530
    %v627 = vunpack.c.l.b16 %v531
    %v628 = vunpack.c.h.b16 %v531
    %v629 = vunpack.c.l.b16 %v532
    %v630 = vunpack.c.h.b16 %v532
    %v631 = vunpack.c.l.b16 %v533
    %v632 = vunpack.c.h.b16 %v533
    %v633 = vunpack.c.l.b16 %v534
    %v634 = vunpack.c.h.b16 %v534
    %v635 = vunpack.c.l.b16 %v535
    %v636 = vunpack.c.h.b16 %v535
    %v637 = vunpack.c.l.b16 %v536
    %v638 = vunpack.c.h.b16 %v536
    %v639 = vunpack.c.l.b16 %v537
    %v640 = vunpack.c.h.b16 %v537
    %v641 = vunpack.c.l.b16 %v538
    %v642 = vunpack.c.h.b16 %v538
    %v643 = vunpack.c.l.b16 %v539
    %v644 = vunpack.c.h.b16 %v539
    %v645 = vunpack.c.l.b16 %v540
    %v646 = vunpack.c.h.b16 %v540
    %v647 = vunpack.c.l.b16 %v541
    %v648 = vunpack.c.h.b16 %v541
    %v649 = vunpack.c.l.b16 %v542
    %v650 = vunpack.c.h.b16 %v542
    %v651 = vpack.c.b16 %v589, %v587
    %v652 = vpack.c.b16 %v590, %v588
    %v653 = vpack.c.b16 %v593, %v591
    %v654 = vpack.c.b16 %v594, %v592
    %v655 = vpack.c.b16 %v597, %v595
    %v656 = vpack.c.b16 %v598, %v596
    %v657 = vpack.c.b16 %v601, %v599
    %v658 = vpack.c.b16 %v602, %v600
    %v659 = vpack.c.b16 %v605, %v603
    %v660 = vpack.c.b16 %v606, %v604
    %v661 = vpack.c.b16 %v609, %v607
    %v662 = vpack.c.b16 %v610, %v608
    %v663 = vpack.c.b16 %v613, %v611
    %v664 = vpack.c.b16 %v614, %v612
    %v665 = vpack.c.b16 %v617, %v615
    %v666 = vpack.c.b16 %v618, %v616
    %v667 = vpack.c.b16 %v621, %v619
    %v668 = vpack.c.b16 %v622, %v620
    %v669 = vpack.c.b16 %v625, %v623
    %v670 = vpack.c.b16 %v626, %v624
    %v671 = vpack.c.b16 %v629, %v627
    %v672 = vpack.c.b16 %v630, %v628
    %v673 = vpack.c.b16 %v633, %v631
    %v674 = vpack.c.b16 %v634, %v632
    %v675 = vpack.c.b16 %v637, %v635
    %v676 = vpack.c.b16 %v638, %v636
    %v677 = vpack.c.b16 %v641, %v639
    %v678 = vpack.c.b16 %v642, %v640
    %v679 = vpack.c.b16 %v645, %v643
    %v680 = vpack.c.b16 %v646, %v644
    %v681 = vpack.c.b16 %v649, %v647
    %v682 = vpack.c.b16 %v650, %v648
    %715 = vmatprep.subr.bf16.mxu0 %v652
    %716 = vmatpush1.bf16.msra.mxu0 %v651
    %717 = vmatprep.subr.bf16.mxu0 %v654
    %718 = vmatpush1.bf16.msra.mxu0 %v653
    %719 = vmatprep.subr.bf16.mxu0 %v656
    %720 = vmatpush1.bf16.msra.mxu0 %v655
    %721 = vmatprep.subr.bf16.mxu0 %v658
    %722 = vmatpush1.bf16.msra.mxu0 %v657
    %723 = vmatprep.subr.bf16.mxu0 %v660
    %724 = vmatpush1.bf16.msra.mxu0 %v659
    %725 = vmatprep.subr.bf16.mxu0 %v662
    %726 = vmatpush1.bf16.msra.mxu0 %v661
    %727 = vmatprep.subr.bf16.mxu0 %v664
    %728 = vmatpush1.bf16.msra.mxu0 %v663
    %729 = vmatprep.subr.bf16.mxu0 %v666
    %730 = vmatpush1.bf16.msra.mxu0 %v665
    %731 = vmatprep.subr.bf16.mxu0 %v668
    %732 = vmatpush1.bf16.msra.mxu0 %v667
    %733 = vmatprep.subr.bf16.mxu0 %v670
    %734 = vmatpush1.bf16.msra.mxu0 %v669
    %735 = vmatprep.subr.bf16.mxu0 %v672
    %736 = vmatpush1.bf16.msra.mxu0 %v671
    %737 = vmatprep.subr.bf16.mxu0 %v674
    %738 = vmatpush1.bf16.msra.mxu0 %v673
    %739 = vmatprep.subr.bf16.mxu0 %v676
    %740 = vmatpush1.bf16.msra.mxu0 %v675
    %741 = vmatprep.subr.bf16.mxu0 %v678
    %742 = vmatpush1.bf16.msra.mxu0 %v677
    %743 = vmatprep.subr.bf16.mxu0 %v680
    %744 = vmatpush1.bf16.msra.mxu0 %v679
    %745 = vmatprep.subr.bf16.mxu0 %v682
    %746 = vmatpush1.bf16.msra.mxu0 %v681
    %747 = vmatprep.mubr.bf16.mxu0 %v510
    %748 = vmatmul.mubr.bf16.gmra.mrb[0].mxu0 %v509
    %v749 = vpop.f32.mrb[0].mxu0
    %v750 = vadd.f32 %v548, %v749
    %v751 = vpop.f32.mrb[0].mxu0
    %v752 = vadd.f32 %v552, %v751
    %v753 = vpop.f32.mrb[0].mxu0
    %v754 = vpop.f32.mrb[0].mxu0
    %755 = vdwg.mxu0
    %v756 = vpack.c.bf16 %v750, %v750
    %v757 = vpack.c.bf16 %v752, %v752
    %v758 = vmin.bf16 %v756, 1101021600
    %v759 = vmin.bf16 %v757, 1101021600
    %v761 = vmul.bf16 %v758, 1069105081
    %v762 = vpow.bf16.pop %v761
    %v764 = vmul.bf16 %v759, 1069105081
    %v765 = vpow.bf16.pop %v764
    %v766 = vadd.bf16 %v762, 1073758208
    %v767 = vadd.bf16 %v765, 1073758208
    %v768 = vmul.bf16 %v762, %v766
    %v769 = vmul.bf16 %v765, %v767
    %v770 = vmul.bf16 %v756, %v768
    %v771 = vmul.bf16 %v757, %v769
    %v772 = vadd.bf16 %v768, 1073758208
    %v773 = vadd.bf16 %v769, 1073758208
    %v774 = vrcp.bf16.pop %v772
    %v775 = vmul.bf16 %v770, %v774
    %v776 = vrcp.bf16.pop %v773
    %v777 = vmul.bf16 %v771, %v776
    %vm778 = vcmp.gt.bf16.partialorder %v756, 1101021600
    %vm779 = vcmp.gt.bf16.partialorder %v757, 1101021600
    %v780 = vsel %vm778, %v756, %v775
    %v781 = vsel %vm779, %v757, %v777
    %v782 = vld [vmem:[#allocation10] sm:$0xff]
    %v783 = vld [vmem:[#allocation10 + $0x8] sm:$0xff]
    %v784 = vld [vmem:[#allocation10 + $0x10] sm:$0xff]
    %v785 = vld [vmem:[#allocation10 + $0x18] sm:$0xff]
    %v786 = vld [vmem:[#allocation10 + $0x20] sm:$0xff]
    %v787 = vld [vmem:[#allocation10 + $0x28] sm:$0xff]
    %v788 = vld [vmem:[#allocation10 + $0x30] sm:$0xff]
    %v789 = vld [vmem:[#allocation10 + $0x38] sm:$0xff]
    %v790 = vld [vmem:[#allocation10 + $0x40] sm:$0xff]
    %v791 = vld [vmem:[#allocation10 + $0x48] sm:$0xff]
    %v792 = vld [vmem:[#allocation10 + $0x50] sm:$0xff]
    %v793 = vld [vmem:[#allocation10 + $0x58] sm:$0xff]
    %v794 = vld [vmem:[#allocation10 + $0x60] sm:$0xff]
    %v795 = vld [vmem:[#allocation10 + $0x68] sm:$0xff]
    %v796 = vld [vmem:[#allocation10 + $0x70] sm:$0xff]
    %v797 = vld [vmem:[#allocation10 + $0x78] sm:$0xff]
    %v798 = vld [vmem:[#allocation10 + $0x80] sm:$0xff]
    %v799 = vld [vmem:[#allocation10 + $0x88] sm:$0xff]
    %v800 = vld [vmem:[#allocation10 + $0x90] sm:$0xff]
    %v801 = vld [vmem:[#allocation10 + $0x98] sm:$0xff]
    %v802 = vld [vmem:[#allocation10 + $0xa0] sm:$0xff]
    %v803 = vld [vmem:[#allocation10 + $0xa8] sm:$0xff]
    %v804 = vld [vmem:[#allocation10 + $0xb0] sm:$0xff]
    %v805 = vld [vmem:[#allocation10 + $0xb8] sm:$0xff]
    %v806 = vld [vmem:[#allocation10 + $0xc0] sm:$0xff]
    %v807 = vld [vmem:[#allocation10 + $0xc8] sm:$0xff]
    %v808 = vld [vmem:[#allocation10 + $0xd0] sm:$0xff]
    %v809 = vld [vmem:[#allocation10 + $0xd8] sm:$0xff]
    %v810 = vld [vmem:[#allocation10 + $0xe0] sm:$0xff]
    %v811 = vld [vmem:[#allocation10 + $0xe8] sm:$0xff]
    %v812 = vld [vmem:[#allocation10 + $0xf0] sm:$0xff]
    %v813 = vld [vmem:[#allocation10 + $0xf8] sm:$0xff]
    %v814 = vld [vmem:[%s11] sm:$0x3]
    %v816 = vlaneseq
    %v817 = vshrl.u32 %v816, 7
    %v818 = vsub.s32 0, %v817
    %v819 = vrot.slane %v814, %v818
    %v820 = vlaneseq
    %v821 = vshrl.u32 %v820, 7
    %v822 = vsub.s32 1, %v821
    %v823 = vrot.slane %v814, %v822
    %v858 = vunpack.c.l.b16 %v782
    %v859 = vunpack.c.h.b16 %v782
    %v860 = vunpack.c.l.b16 %v783
    %v861 = vunpack.c.h.b16 %v783
    %v862 = vunpack.c.l.b16 %v784
    %v863 = vunpack.c.h.b16 %v784
    %v864 = vunpack.c.l.b16 %v785
    %v865 = vunpack.c.h.b16 %v785
    %v866 = vunpack.c.l.b16 %v786
    %v867 = vunpack.c.h.b16 %v786
    %v868 = vunpack.c.l.b16 %v787
    %v869 = vunpack.c.h.b16 %v787
    %v870 = vunpack.c.l.b16 %v788
    %v871 = vunpack.c.h.b16 %v788
    %v872 = vunpack.c.l.b16 %v789
    %v873 = vunpack.c.h.b16 %v789
    %v874 = vunpack.c.l.b16 %v790
    %v875 = vunpack.c.h.b16 %v790
    %v876 = vunpack.c.l.b16 %v791
    %v877 = vunpack.c.h.b16 %v791
    %v878 = vunpack.c.l.b16 %v792
    %v879 = vunpack.c.h.b16 %v792
    %v880 = vunpack.c.l.b16 %v793
    %v881 = vunpack.c.h.b16 %v793
    %v882 = vunpack.c.l.b16 %v794
    %v883 = vunpack.c.h.b16 %v794
    %v884 = vunpack.c.l.b16 %v795
    %v885 = vunpack.c.h.b16 %v795
    %v886 = vunpack.c.l.b16 %v796
    %v887 = vunpack.c.h.b16 %v796
    %v888 = vunpack.c.l.b16 %v797
    %v889 = vunpack.c.h.b16 %v797
    %v890 = vunpack.c.l.b16 %v798
    %v891 = vunpack.c.h.b16 %v798
    %v892 = vunpack.c.l.b16 %v799
    %v893 = vunpack.c.h.b16 %v799
    %v894 = vunpack.c.l.b16 %v800
    %v895 = vunpack.c.h.b16 %v800
    %v896 = vunpack.c.l.b16 %v801
    %v897 = vunpack.c.h.b16 %v801
    %v898 = vunpack.c.l.b16 %v802
    %v899 = vunpack.c.h.b16 %v802
    %v900 = vunpack.c.l.b16 %v803
    %v901 = vunpack.c.h.b16 %v803
    %v902 = vunpack.c.l.b16 %v804
    %v903 = vunpack.c.h.b16 %v804
    %v904 = vunpack.c.l.b16 %v805
    %v905 = vunpack.c.h.b16 %v805
    %v906 = vunpack.c.l.b16 %v806
    %v907 = vunpack.c.h.b16 %v806
    %v908 = vunpack.c.l.b16 %v807
    %v909 = vunpack.c.h.b16 %v807
    %v910 = vunpack.c.l.b16 %v808
    %v911 = vunpack.c.h.b16 %v808
    %v912 = vunpack.c.l.b16 %v809
    %v913 = vunpack.c.h.b16 %v809
    %v914 = vunpack.c.l.b16 %v810
    %v915 = vunpack.c.h.b16 %v810
    %v916 = vunpack.c.l.b16 %v811
    %v917 = vunpack.c.h.b16 %v811
    %v918 = vunpack.c.l.b16 %v812
    %v919 = vunpack.c.h.b16 %v812
    %v920 = vunpack.c.l.b16 %v813
    %v921 = vunpack.c.h.b16 %v813
    %v922 = vpack.c.b16 %v860, %v858
    %v923 = vpack.c.b16 %v861, %v859
    %v924 = vpack.c.b16 %v864, %v862
    %v925 = vpack.c.b16 %v865, %v863
    %v926 = vpack.c.b16 %v868, %v866
    %v927 = vpack.c.b16 %v869, %v867
    %v928 = vpack.c.b16 %v872, %v870
    %v929 = vpack.c.b16 %v873, %v871
    %v930 = vpack.c.b16 %v876, %v874
    %v931 = vpack.c.b16 %v877, %v875
    %v932 = vpack.c.b16 %v880, %v878
    %v933 = vpack.c.b16 %v881, %v879
    %v934 = vpack.c.b16 %v884, %v882
    %v935 = vpack.c.b16 %v885, %v883
    %v936 = vpack.c.b16 %v888, %v886
    %v937 = vpack.c.b16 %v889, %v887
    %v938 = vpack.c.b16 %v892, %v890
    %v939 = vpack.c.b16 %v893, %v891
    %v940 = vpack.c.b16 %v896, %v894
    %v941 = vpack.c.b16 %v897, %v895
    %v942 = vpack.c.b16 %v900, %v898
    %v943 = vpack.c.b16 %v901, %v899
    %v944 = vpack.c.b16 %v904, %v902
    %v945 = vpack.c.b16 %v905, %v903
    %v946 = vpack.c.b16 %v908, %v906
    %v947 = vpack.c.b16 %v909, %v907
    %v948 = vpack.c.b16 %v912, %v910
    %v949 = vpack.c.b16 %v913, %v911
    %v950 = vpack.c.b16 %v916, %v914
    %v951 = vpack.c.b16 %v917, %v915
    %v952 = vpack.c.b16 %v920, %v918
    %v953 = vpack.c.b16 %v921, %v919
    %986 = vmatprep.subr.bf16.mxu0 %v923
    %987 = vmatpush1.bf16.msra.mxu0 %v922
    %988 = vmatprep.subr.bf16.mxu0 %v925
    %989 = vmatpush1.bf16.msra.mxu0 %v924
    %990 = vmatprep.subr.bf16.mxu0 %v927
    %991 = vmatpush1.bf16.msra.mxu0 %v926
    %992 = vmatprep.subr.bf16.mxu0 %v929
    %993 = vmatpush1.bf16.msra.mxu0 %v928
    %994 = vmatprep.subr.bf16.mxu0 %v931
    %995 = vmatpush1.bf16.msra.mxu0 %v930
    %996 = vmatprep.subr.bf16.mxu0 %v933
    %997 = vmatpush1.bf16.msra.mxu0 %v932
    %998 = vmatprep.subr.bf16.mxu0 %v935
    %999 = vmatpush1.bf16.msra.mxu0 %v934
    %1000 = vmatprep.subr.bf16.mxu0 %v937
    %1001 = vmatpush1.bf16.msra.mxu0 %v936
    %1002 = vmatprep.subr.bf16.mxu0 %v939
    %1003 = vmatpush1.bf16.msra.mxu0 %v938
    %1004 = vmatprep.subr.bf16.mxu0 %v941
    %1005 = vmatpush1.bf16.msra.mxu0 %v940
    %1006 = vmatprep.subr.bf16.mxu0 %v943
    %1007 = vmatpush1.bf16.msra.mxu0 %v942
    %1008 = vmatprep.subr.bf16.mxu0 %v945
    %1009 = vmatpush1.bf16.msra.mxu0 %v944
    %1010 = vmatprep.subr.bf16.mxu0 %v947
    %1011 = vmatpush1.bf16.msra.mxu0 %v946
    %1012 = vmatprep.subr.bf16.mxu0 %v949
    %1013 = vmatpush1.bf16.msra.mxu0 %v948
    %1014 = vmatprep.subr.bf16.mxu0 %v951
    %1015 = vmatpush1.bf16.msra.mxu0 %v950
    %1016 = vmatprep.subr.bf16.mxu0 %v953
    %1017 = vmatpush1.bf16.msra.mxu0 %v952
    %1018 = vmatprep.mubr.bf16.mxu0 %v781
    %1019 = vmatmul.mubr.bf16.gmra.mrb[0].mxu0 %v780
    %v1020 = vpop.f32.mrb[0].mxu0
    %v1021 = vadd.f32 %v819, %v1020
    %v1022 = vpop.f32.mrb[0].mxu0
    %v1023 = vadd.f32 %v823, %v1022
    %v1024 = vpop.f32.mrb[0].mxu0
    %v1025 = vpop.f32.mrb[0].mxu0
    %1026 = vdwg.mxu0
    %v1027 = vpack.c.bf16 %v1021, %v1021
    %v1028 = vpack.c.bf16 %v1023, %v1023
    %v1029 = vmin.bf16 %v1027, 1101021600
    %v1030 = vmin.bf16 %v1028, 1101021600
    %v1032 = vmul.bf16 %v1029, 1069105081
    %v1033 = vpow.bf16.pop %v1032
    %v1035 = vmul.bf16 %v1030, 1069105081
    %v1036 = vpow.bf16.pop %v1035
    %v1037 = vadd.bf16 %v1033, 1073758208
    %v1038 = vadd.bf16 %v1036, 1073758208
    %v1039 = vmul.bf16 %v1033, %v1037
    %v1040 = vmul.bf16 %v1036, %v1038
    %v1041 = vmul.bf16 %v1027, %v1039
    %v1042 = vmul.bf16 %v1028, %v1040
    %v1043 = vadd.bf16 %v1039, 1073758208
    %v1044 = vadd.bf16 %v1040, 1073758208
    %v1045 = vrcp.bf16.pop %v1043
    %v1046 = vmul.bf16 %v1041, %v1045
    %v1047 = vrcp.bf16.pop %v1044
    %v1048 = vmul.bf16 %v1042, %v1047
    %vm1049 = vcmp.gt.bf16.partialorder %v1027, 1101021600
    %vm1050 = vcmp.gt.bf16.partialorder %v1028, 1101021600
    %v1051 = vsel %vm1049, %v1027, %v1046
    %v1052 = vsel %vm1050, %v1028, %v1048
    %v1053 = vld [vmem:[#allocation11] sm:$0xf]
    %v1054 = vld [vmem:[#allocation11 + $0x4] sm:$0xf]
    %v1055 = vld [vmem:[#allocation11 + $0x8] sm:$0xf]
    %v1056 = vld [vmem:[#allocation11 + $0xc] sm:$0xf]
    %v1057 = vld [vmem:[#allocation11 + $0x10] sm:$0xf]
    %v1058 = vld [vmem:[#allocation11 + $0x14] sm:$0xf]
    %v1059 = vld [vmem:[#allocation11 + $0x18] sm:$0xf]
    %v1060 = vld [vmem:[#allocation11 + $0x1c] sm:$0xf]
    %v1061 = vld [vmem:[#allocation11 + $0x20] sm:$0xf]
    %v1062 = vld [vmem:[#allocation11 + $0x24] sm:$0xf]
    %v1063 = vld [vmem:[#allocation11 + $0x28] sm:$0xf]
    %v1064 = vld [vmem:[#allocation11 + $0x2c] sm:$0xf]
    %v1065 = vld [vmem:[#allocation11 + $0x30] sm:$0xf]
    %v1066 = vld [vmem:[#allocation11 + $0x34] sm:$0xf]
    %v1067 = vld [vmem:[#allocation11 + $0x38] sm:$0xf]
    %v1068 = vld [vmem:[#allocation11 + $0x3c] sm:$0xf]
    %v1069 = vld [vmem:[#allocation11 + $0x40] sm:$0xf]
    %v1070 = vld [vmem:[#allocation11 + $0x44] sm:$0xf]
    %v1071 = vld [vmem:[#allocation11 + $0x48] sm:$0xf]
    %v1072 = vld [vmem:[#allocation11 + $0x4c] sm:$0xf]
    %v1073 = vld [vmem:[#allocation11 + $0x50] sm:$0xf]
    %v1074 = vld [vmem:[#allocation11 + $0x54] sm:$0xf]
    %v1075 = vld [vmem:[#allocation11 + $0x58] sm:$0xf]
    %v1076 = vld [vmem:[#allocation11 + $0x5c] sm:$0xf]
    %v1077 = vld [vmem:[#allocation11 + $0x60] sm:$0xf]
    %v1078 = vld [vmem:[#allocation11 + $0x64] sm:$0xf]
    %v1079 = vld [vmem:[#allocation11 + $0x68] sm:$0xf]
    %v1080 = vld [vmem:[#allocation11 + $0x6c] sm:$0xf]
    %v1081 = vld [vmem:[#allocation11 + $0x70] sm:$0xf]
    %v1082 = vld [vmem:[#allocation11 + $0x74] sm:$0xf]
    %v1083 = vld [vmem:[#allocation11 + $0x78] sm:$0xf]
    %v1084 = vld [vmem:[#allocation11 + $0x7c] sm:$0xf]
    %v1085 = vld [vmem:[#allocation13] sm:$0x1]
    %v1087 = vlaneseq
    %v1088 = vshrl.u32 %v1087, 7
    %v1089 = vsub.s32 0, %v1088
    %v1090 = vrot.slane %v1085, %v1089
    %v1124 = vunpack.c.l.b16 %v1053
    %v1125 = vunpack.c.l.b16 %v1054
    %v1126 = vunpack.c.l.b16 %v1055
    %v1127 = vunpack.c.l.b16 %v1056
    %v1128 = vunpack.c.l.b16 %v1057
    %v1129 = vunpack.c.l.b16 %v1058
    %v1130 = vunpack.c.l.b16 %v1059
    %v1131 = vunpack.c.l.b16 %v1060
    %v1132 = vunpack.c.l.b16 %v1061
    %v1133 = vunpack.c.l.b16 %v1062
    %v1134 = vunpack.c.l.b16 %v1063
    %v1135 = vunpack.c.l.b16 %v1064
    %v1136 = vunpack.c.l.b16 %v1065
    %v1137 = vunpack.c.l.b16 %v1066
    %v1138 = vunpack.c.l.b16 %v1067
    %v1139 = vunpack.c.l.b16 %v1068
    %v1140 = vunpack.c.l.b16 %v1069
    %v1141 = vunpack.c.l.b16 %v1070
    %v1142 = vunpack.c.l.b16 %v1071
    %v1143 = vunpack.c.l.b16 %v1072
    %v1144 = vunpack.c.l.b16 %v1073
    %v1145 = vunpack.c.l.b16 %v1074
    %v1146 = vunpack.c.l.b16 %v1075
    %v1147 = vunpack.c.l.b16 %v1076
    %v1148 = vunpack.c.l.b16 %v1077
    %v1149 = vunpack.c.l.b16 %v1078
    %v1150 = vunpack.c.l.b16 %v1079
    %v1151 = vunpack.c.l.b16 %v1080
    %v1152 = vunpack.c.l.b16 %v1081
    %v1153 = vunpack.c.l.b16 %v1082
    %v1154 = vunpack.c.l.b16 %v1083
    %v1155 = vunpack.c.l.b16 %v1084
    %v1156 = vpack.c.b16 %v1125, %v1124
    %v1157 = vpack.c.b16 %v1127, %v1126
    %v1158 = vpack.c.b16 %v1129, %v1128
    %v1159 = vpack.c.b16 %v1131, %v1130
    %v1160 = vpack.c.b16 %v1133, %v1132
    %v1161 = vpack.c.b16 %v1135, %v1134
    %v1162 = vpack.c.b16 %v1137, %v1136
    %v1163 = vpack.c.b16 %v1139, %v1138
    %v1164 = vpack.c.b16 %v1141, %v1140
    %v1165 = vpack.c.b16 %v1143, %v1142
    %v1166 = vpack.c.b16 %v1145, %v1144
    %v1167 = vpack.c.b16 %v1147, %v1146
    %v1168 = vpack.c.b16 %v1149, %v1148
    %v1169 = vpack.c.b16 %v1151, %v1150
    %v1170 = vpack.c.b16 %v1153, %v1152
    %v1171 = vpack.c.b16 %v1155, %v1154
    %1188 = vmatprep.subr.bf16.mxu0 0
    %1189 = vmatpush1.bf16.msra.mxu0 %v1156
    %1190 = vmatprep.subr.bf16.mxu0 0
    %1191 = vmatpush1.bf16.msra.mxu0 %v1157
    %1192 = vmatprep.subr.bf16.mxu0 0
    %1193 = vmatpush1.bf16.msra.mxu0 %v1158
    %1194 = vmatprep.subr.bf16.mxu0 0
    %1195 = vmatpush1.bf16.msra.mxu0 %v1159
    %1196 = vmatprep.subr.bf16.mxu0 0
    %1197 = vmatpush1.bf16.msra.mxu0 %v1160
    %1198 = vmatprep.subr.bf16.mxu0 0
    %1199 = vmatpush1.bf16.msra.mxu0 %v1161
    %1200 = vmatprep.subr.bf16.mxu0 0
    %1201 = vmatpush1.bf16.msra.mxu0 %v1162
    %1202 = vmatprep.subr.bf16.mxu0 0
    %1203 = vmatpush1.bf16.msra.mxu0 %v1163
    %1204 = vmatprep.subr.bf16.mxu0 0
    %1205 = vmatpush1.bf16.msra.mxu0 %v1164
    %1206 = vmatprep.subr.bf16.mxu0 0
    %1207 = vmatpush1.bf16.msra.mxu0 %v1165
    %1208 = vmatprep.subr.bf16.mxu0 0
    %1209 = vmatpush1.bf16.msra.mxu0 %v1166
    %1210 = vmatprep.subr.bf16.mxu0 0
    %1211 = vmatpush1.bf16.msra.mxu0 %v1167
    %1212 = vmatprep.subr.bf16.mxu0 0
    %1213 = vmatpush1.bf16.msra.mxu0 %v1168
    %1214 = vmatprep.subr.bf16.mxu0 0
    %1215 = vmatpush1.bf16.msra.mxu0 %v1169
    %1216 = vmatprep.subr.bf16.mxu0 0
    %1217 = vmatpush1.bf16.msra.mxu0 %v1170
    %1218 = vmatprep.subr.bf16.mxu0 0
    %1219 = vmatpush1.bf16.msra.mxu0 %v1171
    %1220 = vmatprep.mubr.bf16.mxu0 %v1052
    %1221 = vmatmul.mubr.bf16.gmra.mrb[0].mxu0 %v1051
    %v1222 = vpop.f32.mrb[0].mxu0
    %v1223 = vadd.f32 %v1090, %v1222
    %v1224 = vpop.f32.mrb[0].mxu0
    %v1225 = vpop.f32.mrb[0].mxu0
    %v1226 = vpop.f32.mrb[0].mxu0
    %1227 = vdwg.mxu0
    %1228 = vst [vmem:[#allocation14] sm:$0xf] %v1223
    // Predicated region
    $region86: #{timemlp_forward.1} parent=1 // pred_check
      _
    $region87: #{timemlp_forward.1} parent=1 // pred_check_branch
      %1230 = sbr.rel (0) target = $region89
    $region88: #{timemlp_forward.1} parent=1 // pred_region
      %s1232 = ssub.s32 64, 64
      %1233 = vsyncadd [#allocation4], %s1232
      %s1235 = sshll.u32 [#allocation14], 4
      %s1236 = int_to_ptr.vmem [resolvable:$true] %s1235
      %1238 = dma.vmem_to_hbm [thread:$0]  %s1236, 64, %s14, [#allocation4]
    $region89: #{timemlp_forward.1} parent=1 // pred_fallthru
      _
    // Predicated region
    $region90: #{timemlp_forward.1} parent=1 // pred_check
      _
    $region91: #{timemlp_forward.1} parent=1 // pred_check_branch
      %1240 = sbr.rel (0) target = $region93
    $region92: #{timemlp_forward.1} parent=1 // pred_region
      %1241 = dma.done [#allocation4], 64
    $region93: #{timemlp_forward.1} parent=1 // pred_fallthru
      _
    %1242 = vsyncpa [#allocation3], 1
    %1243 = vsyncpa [#allocation6], 1
    %1244 = vsyncpa [#allocation9], 1
    %1245 = vsyncpa [#allocation12], 1
    %1246 = vsyncpa [#allocation4], 1

</llo_original>
